<compile_context>
chip_gen: v7x
topology: tpu7x:2x2x1
jax: 0.10.0
libtpu: 0.0.40
codegen_flags: <defaults>
</compile_context>

<pallas_src>
import jax
import jax.numpy as jnp
from jax.experimental import pallas as pl
from jax.experimental.pallas import tpu as pltpu


def _regression_kernel(x_ref, w_ref, b_ref, o_ref):
    # x_ref: [TB, F] (VMEM, caller dtype), w_ref: [1, F] (VMEM, f32), b_ref: [1] (SMEM, f32)
    x = x_ref[...].astype(jnp.float32)                 # per-tile upcast -> f32 math
    w = w_ref[...]                                     # [1, F], broadcasts over sublanes
    row = jnp.sum(x * w, axis=-1) + b_ref[0]           # VPU mul + XLU lane-reduce -> [TB]
    # Lane-dense store: output block is [1, TB] -> full unmasked vector stores.
    o_ref[...] = jnp.reshape(row, (1, -1))


def _round_up(x, m):
    return ((x + m - 1) // m) * m


def _pick_tb(batch, tb_max):
    """Balanced batch tile: full block for small B, else >=2 balanced 128-multiple tiles."""
    if batch <= 1024:
        return batch                                   # single full-array block (always legal)
    n_tiles = max(2, pl.cdiv(batch, tb_max))
    if n_tiles % 2:
        n_tiles += 1                                   # even tile count -> balances v7x's 2 TCs
    tb = _round_up(pl.cdiv(batch, n_tiles), 128)       # 128-multiple -> unmasked output stores
    return max(128, min(tb, tb_max))


def regression_forward(x, weight, bias, *, tb_max=16384, xla_fastpath_below=2048,
                       force_pallas=False):
    """x: [B, F] (any float dtype); weight: [1, F] (nn.Linear layout); bias: [1] -> out [B, 1] f32."""
    B, F = x.shape
    weight = weight.astype(jnp.float32)                # tiny: cast once in wrapper
    bias = bias.astype(jnp.float32)

    # Tiny batches: pallas_call launch + slice/reshape overhead exceeds the work.
    if (not force_pallas) and B < xla_fastpath_below:
        return x.astype(jnp.float32) @ weight.T + bias

    tb = _pick_tb(B, tb_max)
    grid_b = pl.cdiv(B, tb)
    b_pad = grid_b * tb                                # padded, lane-dense output width

    out = pl.pallas_call(
        _regression_kernel,
        out_shape=jax.ShapeDtypeStruct((1, b_pad), jnp.float32),
        grid=(grid_b,),
        in_specs=[
            pl.BlockSpec((tb, F), lambda i: (i, 0)),             # x: pipelined batch tiles (caller dtype)
            pl.BlockSpec((1, F), lambda i: (0, 0)),              # weight: lane-major, reused every step
            pl.BlockSpec(memory_space=pltpu.MemorySpace.SMEM),   # bias: scalar in SMEM
        ],
        out_specs=pl.BlockSpec((1, tb), lambda i: (0, i)),       # lane-dense output slab
        compiler_params=pltpu.CompilerParams(
            dimension_semantics=("parallel",),                   # shard batch tiles across TCs (v7x)
            vmem_limit_bytes=40 * 1024 * 1024,                   # fits lane-padded 16K-row f32 tiles x2
        ),
        cost_estimate=pl.CostEstimate(
            flops=2 * B * F,
            transcendentals=0,
            bytes_accessed=x.dtype.itemsize * B * F + 4 * (F + 1 + B),
        ),
    )(x, weight, bias)

    # Garbage from the padded edge block lands in lanes >= B and is discarded here.
    return out[0, :B].reshape(B, 1)


if __name__ == "__main__":
    # Module hyperparameters (consistent with the forward's math).
    sensor_num = 5
    window_size = 8
    in_features = sensor_num - 1 + 2 * window_size     # = 20

    key = jax.random.PRNGKey(0)
    kx1, kx2, kw, kb = jax.random.split(key, 4)

    # Deterministic init mimicking nn.Linear default: uniform(+-1/sqrt(fan_in)).
    bound = 1.0 / jnp.sqrt(jnp.float32(in_features))
    weight = jax.random.uniform(kw, (1, in_features), jnp.float32, -bound, bound)
    bias = jax.random.uniform(kb, (1,), jnp.float32, -bound, bound)

    # 1) Small batch, forced through the Pallas kernel (single full-array block).
    x_small = jax.random.normal(kx1, (8, in_features), jnp.float32)
    out_small = jax.block_until_ready(
        regression_forward(x_small, weight, bias, force_pallas=True))
    ref_small = x_small @ weight.T + bias
    assert out_small.shape == (8, 1)
    assert jnp.allclose(out_small, ref_small, atol=1e-5, rtol=1e-5)

    # 2) Larger ragged batch: exercises balanced tiling, edge-block padding,
    #    and the megacore "parallel" split (still tiny: 6000x20 f32 = 480 KiB).
    x_big = jax.random.normal(kx2, (6000, in_features), jnp.float32)
    out_big = jax.block_until_ready(regression_forward(x_big, weight, bias))
    ref_big = x_big @ weight.T + bias
    assert out_big.shape == (6000, 1)
    assert jnp.allclose(out_big, ref_big, atol=1e-5, rtol=1e-5)

    print("KERNEL_OK")
</pallas_src>

<mosaic_0001>
module attributes {stable_mosaic.version = 11 : i64} {
  func.func @_regression_kernel(%arg0: i32, %arg1: memref<8x20xf32, #tpu.memory_space<vmem>>, %arg2: memref<1x20xf32, #tpu.memory_space<vmem>>, %arg3: memref<1xf32, #tpu.memory_space<smem>>, %arg4: memref<1x8xf32, #tpu.memory_space<vmem>>) attributes {dimension_semantics = [#tpu.dimension_semantics<parallel>], iteration_bounds = array<i64: 1>, scalar_prefetch = 0 : i64, scratch_operands = 0 : i64, tpu.core_type = #tpu.core_type<tc>, window_params = [{transform_indices = @transform_0, window_bounds = array<i64: 8, 20>}, {pipeline_mode = #tpu.pipeline_mode<synchronous>, transform_indices = @transform_1, window_bounds = array<i64: 1, 20>}, {transform_indices = @transform_2, window_bounds = array<i64: 1>}, {transform_indices = @transform_3, window_bounds = array<i64: 1, 8>}]} {
    %c0 = arith.constant 0 : index
    %c0_0 = arith.constant 0 : index
    %0 = vector.load %arg1[%c0, %c0_0] : memref<8x20xf32, #tpu.memory_space<vmem>>, vector<8x20xf32>
    %c0_1 = arith.constant 0 : index
    %c0_2 = arith.constant 0 : index
    %1 = vector.load %arg2[%c0_1, %c0_2] : memref<1x20xf32, #tpu.memory_space<vmem>>, vector<1x20xf32>
    %2 = vector.broadcast %1 : vector<1x20xf32> to vector<8x20xf32>
    %3 = arith.mulf %0, %2 : vector<8x20xf32>
    %cst = arith.constant dense<0.000000e+00> : vector<8xf32>
    %4 = vector.multi_reduction <add>, %3, %cst [1] : vector<8x20xf32> to vector<8xf32>
    %c0_3 = arith.constant 0 : index
    %5 = memref.load %arg3[%c0_3] : memref<1xf32, #tpu.memory_space<smem>>
    %6 = vector.broadcast %5 : f32 to vector<8xf32>
    %7 = arith.addf %4, %6 : vector<8xf32>
    %8 = vector.shape_cast %7 : vector<8xf32> to vector<1x8xf32>
    %c0_4 = arith.constant 0 : index
    %c0_5 = arith.constant 0 : index
    %9 = vector.load %arg4[%c0_4, %c0_5] : memref<1x8xf32, #tpu.memory_space<vmem>>, vector<1x8xf32>
    tpu.vector_store %arg4[%c0_4, %c0_5], %8 {strides = array<i32>} : memref<1x8xf32, #tpu.memory_space<vmem>>, vector<1x8xf32>,
    return
  }
  func.func @transform_0(%arg0: i32) -> (i32, i32) {
    %c0_i32 = arith.constant 0 : i32
    %c0_i32_0 = arith.constant 0 : i32
    return %arg0, %c0_i32 : i32, i32
  }
  func.func @transform_1(%arg0: i32) -> (i32, i32) {
    %c0_i32 = arith.constant 0 : i32
    %c0_i32_0 = arith.constant 0 : i32
    %c0_i32_1 = arith.constant 0 : i32
    return %c0_i32, %c0_i32_0 : i32, i32
  }
  func.func @transform_2(%arg0: i32) -> i32 {
    %c0_i32 = arith.constant 0 : i32
    %c0_i32_0 = arith.constant 0 : i32
    return %c0_i32 : i32
  }
  func.func @transform_3(%arg0: i32) -> (i32, i32) {
    %c0_i32 = arith.constant 0 : i32
    %c0_i32_0 = arith.constant 0 : i32
    return %c0_i32, %arg0 : i32, i32
  }
}

</mosaic_0001>

<llo_original>
// kernel: tpu_custom_call.1
$region0: #{tpu_custom_call.1}
  #allocation0 [shape = 'u32[]', space=smem, size = 0x4, offset = 0x4, fixed_abs, tag = 'smem constant byte address 0x4 - core index']
  #allocation1 [shape = 'u32[144,128]{1,0:T(1,128)}', space=vmem, size = 0x12000, scoped, tag = 'internal scratch']
  #allocation2 [shape = 'f32[1]{0:T(128)S(6)}', space=smem, size = 0x200, scoped, tag = 'scoped memory for tpu_custom_call.1']
  %s0 = inlined_call_operand.hbm [shape: f32[8,20], index: 0, kind: input, shape index: {}]
  %s1 = inlined_call_operand.vmem [shape: f32[1,20], index: 1, kind: input, shape index: {}]
  %s2 = inlined_call_operand.<no memory space> [shape: f32[1], index: 2, kind: input, shape index: {}]
  %s3 = inlined_call_operand.hbm [shape: f32[1,8], index: 3, kind: output, shape index: {}]
  %s4 = sld [smem:[#allocation0]]
  $region26: #{tpu_custom_call.1} parent=0
    _
  %s6 = ssub.s32 1, %s4
  %s7 = scalar_select 0, %s6, %s4
  %8 = sst [smem:[#allocation2]] %s2
  $region1: #{tpu_custom_call.1} parent=0
    #allocation3 [shape = 'u8[4096]{0}', space=vmem, size = 0x1000, scoped, tag = 'input window, operand 0, single buffered']
    #allocation4 [shape = 's32[1]{0}', space=sflag, size = 0x4, scoped, tag = 'scoped memory for tpu_custom_call.1']
    #allocation5 [shape = 's32[1]{0}', space=sflag, size = 0x4, scoped, tag = 'scoped memory for tpu_custom_call.1']
    #allocation6 [shape = 'u8[512]{0}', space=vmem, size = 0x400, scoped, tag = 'output window, operand 0, single buffered']
    %9 = vsyncpa [#allocation4], 0
    %10 = vsyncpa [#allocation5], 0
    // Predicated region
    $region2: #{tpu_custom_call.1} parent=1 // pred_check
      _
    $region3: #{tpu_custom_call.1} parent=1 // pred_check_branch
      %12 = sbr.rel (0) target = $region5
    $region4: #{tpu_custom_call.1} parent=1 // pred_region
      %s14 = ssub.s32 128, 128
      %15 = vsyncadd [#allocation4], %s14
      %s17 = sshll.u32 [#allocation3], 4
      %s18 = int_to_ptr.vmem [resolvable:$true] %s17
      %20 = dma.hbm_to_vmem [thread:$0]  %s0, 128, %s18, [#allocation4]
    $region5: #{tpu_custom_call.1} parent=1 // pred_fallthru
      _
    // Predicated region
    $region6: #{tpu_custom_call.1} parent=1 // pred_check
      _
    $region7: #{tpu_custom_call.1} parent=1 // pred_check_branch
      %22 = sbr.rel (0) target = $region9
    $region8: #{tpu_custom_call.1} parent=1 // pred_region
      _
    $region9: #{tpu_custom_call.1} parent=1 // pred_fallthru
      _
    // Predicated region
    $region10: #{tpu_custom_call.1} parent=1 // pred_check
      _
    $region11: #{tpu_custom_call.1} parent=1 // pred_check_branch
      %24 = sbr.rel (0) target = $region13
    $region12: #{tpu_custom_call.1} parent=1 // pred_region
      _
    $region13: #{tpu_custom_call.1} parent=1 // pred_fallthru
      _
    // Predicated region
    $region14: #{tpu_custom_call.1} parent=1 // pred_check
      _
    $region15: #{tpu_custom_call.1} parent=1 // pred_check_branch
      %26 = sbr.rel (0) target = $region17
    $region16: #{tpu_custom_call.1} parent=1 // pred_region
      %27 = dma.done [#allocation4], 128
    $region17: #{tpu_custom_call.1} parent=1 // pred_fallthru
      _
    %v28 = vld [vmem:[#allocation3] sm:$0xff]
    %v29 = vld [vmem:[%s1] sm:$0x1]
    %v31 = vlaneseq
    %v32 = vshrl.u32 %v31, 7
    %v33 = vsub.s32 0, %v32
    %v34 = vrot.slane %v29, %v33
    %v36 = vmul.f32 %v28, %v34
    %vm37 = vcmask 162816
    %v38 = vsel %vm37, %v36, 0.0
    %39 = vadd.xlane.f32.xlu0 %v38
    %v40 = vpop.xlane.xlu0 %39
    %s41 = sld [smem:[#allocation2]]
    %v42 = vstv %s41
    %v43 = vadd.f32 %v40, %v42
    %v45 = vlaneseq
    %v46 = vand.u32 %v45, 127
    %v47 = vlaneseq
    %v48 = vshrl.u32 %v47, 7
    %v49 = vsub.s32 %v46, %v48
    %v50 = vrot.slane %v43, %v49
    %vm52 = vcmask 57344
    %53 = vst.msk [vmem:[#allocation6] sm:$0x1] %vm52, %v50
    // Predicated region
    $region18: #{tpu_custom_call.1} parent=1 // pred_check
      _
    $region19: #{tpu_custom_call.1} parent=1 // pred_check_branch
      %55 = sbr.rel (0) target = $region21
    $region20: #{tpu_custom_call.1} parent=1 // pred_region
      %s57 = ssub.s32 16, 16
      %58 = vsyncadd [#allocation5], %s57
      %s60 = sshll.u32 [#allocation6], 4
      %s61 = int_to_ptr.vmem [resolvable:$true] %s60
      %63 = dma.vmem_to_hbm [thread:$0]  %s61, 16, %s3, [#allocation5]
    $region21: #{tpu_custom_call.1} parent=1 // pred_fallthru
      _
    // Predicated region
    $region22: #{tpu_custom_call.1} parent=1 // pred_check
      _
    $region23: #{tpu_custom_call.1} parent=1 // pred_check_branch
      %65 = sbr.rel (0) target = $region25
    $region24: #{tpu_custom_call.1} parent=1 // pred_region
      %66 = dma.done [#allocation5], 16
    $region25: #{tpu_custom_call.1} parent=1 // pred_fallthru
      _
    %67 = vsyncpa [#allocation4], 1
    %68 = vsyncpa [#allocation5], 1

</llo_original>
